<compile_context>
chip_gen: v7x
topology: tpu7x:2x2x1
jax: 0.10.0
libtpu: 0.0.40
codegen_flags: <defaults>
</compile_context>

<pallas_src>
import jax
import jax.numpy as jnp
from jax.experimental import pallas as pl
from jax.experimental.pallas import tpu as pltpu


def _round_up(n, m):
    return ((n + m - 1) // m) * m


def dqn_kernel(x_ref, w1_ref, b1_ref, w2_ref, b2_ref, w3_ref, b3_ref, o_ref):
    # fc1 + ReLU  (bf16 operands on the MXU, f32 accumulate / epilogue)
    h1 = jnp.dot(x_ref[...].astype(jnp.bfloat16), w1_ref[...],
                 preferred_element_type=jnp.float32)
    h1 = jnp.maximum(h1 + b1_ref[...], 0.0)
    # fc2 + ReLU
    h2 = jnp.dot(h1.astype(jnp.bfloat16), w2_ref[...],
                 preferred_element_type=jnp.float32)
    h2 = jnp.maximum(h2 + b2_ref[...], 0.0)
    # fc3 (no activation)
    out = jnp.dot(h2.astype(jnp.bfloat16), w3_ref[...],
                  preferred_element_type=jnp.float32)
    o_ref[...] = (out + b3_ref[...]).astype(o_ref.dtype)


def dqn_forward(x, params, *, block_b=512):
    """Fused forward pass. x: [B, input_size] float32. Returns [B, output_size] float32."""
    w1, b1, w2, b2, w3, b3 = params
    B, in_size = x.shape
    out_size = w3.shape[1]

    # Weights go to HBM/VMEM as bf16 (half the DMA bytes, 1 MXU pass); biases stay f32.
    w1b, w2b, w3b = (w.astype(jnp.bfloat16) for w in (w1, w2, w3))

    # Batch tile: large multiple of 8 sublanes, capped at block_b. Pad B up to a
    # tile multiple so the (TB, feat) BlockSpec is exact; slice the result back.
    tb = min(block_b, _round_up(B, 8))
    b_padded = _round_up(B, tb)
    if b_padded != B:
        x = jnp.pad(x, ((0, b_padded - B), (0, 0)))

    batch_spec = lambda feat: pl.BlockSpec((tb, feat), lambda i: (i, 0))
    pinned = lambda a: pl.BlockSpec(a.shape, lambda i: (0, 0))  # VMEM-resident across steps

    out = pl.pallas_call(
        dqn_kernel,
        out_shape=jax.ShapeDtypeStruct((b_padded, out_size), jnp.float32),
        grid_spec=pltpu.PrefetchScalarGridSpec(
            num_scalar_prefetch=0,
            grid=(b_padded // tb,),
            in_specs=[
                batch_spec(in_size),
                pinned(w1b), pinned(b1),
                pinned(w2b), pinned(b2),
                pinned(w3b), pinned(b3),
            ],
            out_specs=batch_spec(out_size),
        ),
        compiler_params=pltpu.CompilerParams(
            dimension_semantics=("parallel",),
        ),
    )(x, w1b, b1, w2b, b2, w3b, b3)

    return out[:B] if b_padded != B else out


def init_dqn_params(key, input_size, output_size):
    """Deterministic init mirroring nn.Linear's default U(-1/sqrt(fan_in), +1/sqrt(fan_in))."""
    sizes = [(input_size, 128), (128, 64), (64, output_size)]
    params = []
    for fan_in, fan_out in sizes:
        kw, kb, key = jax.random.split(key, 3)
        bound = 1.0 / jnp.sqrt(jnp.float32(fan_in))
        w = jax.random.uniform(kw, (fan_in, fan_out), jnp.float32, -bound, bound)
        b = jax.random.uniform(kb, (1, fan_out), jnp.float32, -bound, bound)
        params += [w, b]
    return tuple(params)


def dqn_reference(x, params):
    """Pure-JAX reference with the same bf16-operand / f32-accumulate contract."""
    w1, b1, w2, b2, w3, b3 = params

    def lin(a, w, b):
        return jnp.dot(a.astype(jnp.bfloat16), w.astype(jnp.bfloat16),
                       preferred_element_type=jnp.float32) + b

    h1 = jax.nn.relu(lin(x, w1, b1))
    h2 = jax.nn.relu(lin(h1, w2, b2))
    return lin(h2, w3, b3)


if __name__ == "__main__":
    key = jax.random.PRNGKey(0)
    kx, kp = jax.random.split(key)

    # Small but grid-exercising shapes: batch 200 with tile 128 -> padded 256, 2 grid steps.
    batch, input_size, output_size = 200, 32, 8
    x = jax.random.normal(kx, (batch, input_size), jnp.float32)
    params = init_dqn_params(kp, input_size, output_size)

    out = dqn_forward(x, params, block_b=128)
    jax.block_until_ready(out)

    ref = dqn_reference(x, params)
    assert out.shape == (batch, output_size)
    assert jnp.allclose(out, ref, atol=1e-2, rtol=1e-2), "mismatch vs reference"

    print("KERNEL_OK")
</pallas_src>

<mosaic_0001>
module attributes {stable_mosaic.version = 11 : i64} {
  func.func @dqn_kernel(%arg0: i32, %arg1: memref<128x32xf32, #tpu.memory_space<vmem>>, %arg2: memref<32x128xbf16, #tpu.memory_space<vmem>>, %arg3: memref<1x128xf32, #tpu.memory_space<vmem>>, %arg4: memref<128x64xbf16, #tpu.memory_space<vmem>>, %arg5: memref<1x64xf32, #tpu.memory_space<vmem>>, %arg6: memref<64x8xbf16, #tpu.memory_space<vmem>>, %arg7: memref<1x8xf32, #tpu.memory_space<vmem>>, %arg8: memref<128x8xf32, #tpu.memory_space<vmem>>) attributes {dimension_semantics = [#tpu.dimension_semantics<parallel>], iteration_bounds = array<i64: 2>, scalar_prefetch = 0 : i64, scratch_operands = 0 : i64, tpu.core_type = #tpu.core_type<tc>, window_params = [{transform_indices = @transform_0, window_bounds = array<i64: 128, 32>}, {pipeline_mode = #tpu.pipeline_mode<synchronous>, transform_indices = @transform_1, window_bounds = array<i64: 32, 128>}, {pipeline_mode = #tpu.pipeline_mode<synchronous>, transform_indices = @transform_2, window_bounds = array<i64: 1, 128>}, {pipeline_mode = #tpu.pipeline_mode<synchronous>, transform_indices = @transform_3, window_bounds = array<i64: 128, 64>}, {pipeline_mode = #tpu.pipeline_mode<synchronous>, transform_indices = @transform_4, window_bounds = array<i64: 1, 64>}, {pipeline_mode = #tpu.pipeline_mode<synchronous>, transform_indices = @transform_5, window_bounds = array<i64: 64, 8>}, {pipeline_mode = #tpu.pipeline_mode<synchronous>, transform_indices = @transform_6, window_bounds = array<i64: 1, 8>}, {transform_indices = @transform_7, window_bounds = array<i64: 128, 8>}]} {
    %c0 = arith.constant 0 : index
    %c0_0 = arith.constant 0 : index
    %0 = vector.load %arg1[%c0, %c0_0] : memref<128x32xf32, #tpu.memory_space<vmem>>, vector<128x32xf32>
    %1 = arith.truncf %0 : vector<128x32xf32> to vector<128x32xbf16>
    %c0_1 = arith.constant 0 : index
    %c0_2 = arith.constant 0 : index
    %2 = vector.load %arg2[%c0_1, %c0_2] : memref<32x128xbf16, #tpu.memory_space<vmem>>, vector<32x128xbf16>
    %cst = arith.constant dense<0.000000e+00> : vector<128x128xf32>
    %3 = tpu.matmul %1, %2, %cst {dimension_numbers = #tpu.dot_dimension_numbers<[1], [0], [0], [1], [0, 0, 1, 1], [], []>} : vector<128x32xbf16>, vector<32x128xbf16>, vector<128x128xf32> -> vector<128x128xf32>
    %c0_3 = arith.constant 0 : index
    %c0_4 = arith.constant 0 : index
    %4 = vector.load %arg3[%c0_3, %c0_4] : memref<1x128xf32, #tpu.memory_space<vmem>>, vector<1x128xf32>
    %5 = vector.broadcast %4 : vector<1x128xf32> to vector<128x128xf32>
    %6 = arith.addf %3, %5 : vector<128x128xf32>
    %cst_5 = arith.constant 0.000000e+00 : f32
    %7 = vector.broadcast %cst_5 : f32 to vector<128x128xf32>
    %8 = arith.maximumf %6, %7 : vector<128x128xf32>
    %9 = arith.truncf %8 : vector<128x128xf32> to vector<128x128xbf16>
    %c0_6 = arith.constant 0 : index
    %c0_7 = arith.constant 0 : index
    %10 = vector.load %arg4[%c0_6, %c0_7] : memref<128x64xbf16, #tpu.memory_space<vmem>>, vector<128x64xbf16>
    %cst_8 = arith.constant dense<0.000000e+00> : vector<128x64xf32>
    %11 = tpu.matmul %9, %10, %cst_8 {dimension_numbers = #tpu.dot_dimension_numbers<[1], [0], [0], [1], [0, 0, 1, 1], [], []>} : vector<128x128xbf16>, vector<128x64xbf16>, vector<128x64xf32> -> vector<128x64xf32>
    %c0_9 = arith.constant 0 : index
    %c0_10 = arith.constant 0 : index
    %12 = vector.load %arg5[%c0_9, %c0_10] : memref<1x64xf32, #tpu.memory_space<vmem>>, vector<1x64xf32>
    %13 = vector.broadcast %12 : vector<1x64xf32> to vector<128x64xf32>
    %14 = arith.addf %11, %13 : vector<128x64xf32>
    %cst_11 = arith.constant 0.000000e+00 : f32
    %15 = vector.broadcast %cst_11 : f32 to vector<128x64xf32>
    %16 = arith.maximumf %14, %15 : vector<128x64xf32>
    %17 = arith.truncf %16 : vector<128x64xf32> to vector<128x64xbf16>
    %c0_12 = arith.constant 0 : index
    %c0_13 = arith.constant 0 : index
    %18 = vector.load %arg6[%c0_12, %c0_13] : memref<64x8xbf16, #tpu.memory_space<vmem>>, vector<64x8xbf16>
    %cst_14 = arith.constant dense<0.000000e+00> : vector<128x8xf32>
    %19 = tpu.matmul %17, %18, %cst_14 {dimension_numbers = #tpu.dot_dimension_numbers<[1], [0], [0], [1], [0, 0, 1, 1], [], []>} : vector<128x64xbf16>, vector<64x8xbf16>, vector<128x8xf32> -> vector<128x8xf32>
    %c0_15 = arith.constant 0 : index
    %c0_16 = arith.constant 0 : index
    %20 = vector.load %arg7[%c0_15, %c0_16] : memref<1x8xf32, #tpu.memory_space<vmem>>, vector<1x8xf32>
    %21 = vector.broadcast %20 : vector<1x8xf32> to vector<128x8xf32>
    %22 = arith.addf %19, %21 : vector<128x8xf32>
    %c0_17 = arith.constant 0 : index
    %c0_18 = arith.constant 0 : index
    %23 = vector.load %arg8[%c0_17, %c0_18] : memref<128x8xf32, #tpu.memory_space<vmem>>, vector<128x8xf32>
    tpu.vector_store %arg8[%c0_17, %c0_18], %22 {strides = array<i32>} : memref<128x8xf32, #tpu.memory_space<vmem>>, vector<128x8xf32>,
    return
  }
  func.func @transform_0(%arg0: i32) -> (i32, i32) {
    %c0_i32 = arith.constant 0 : i32
    %c0_i32_0 = arith.constant 0 : i32
    return %arg0, %c0_i32 : i32, i32
  }
  func.func @transform_1(%arg0: i32) -> (i32, i32) {
    %c0_i32 = arith.constant 0 : i32
    %c0_i32_0 = arith.constant 0 : i32
    %c0_i32_1 = arith.constant 0 : i32
    return %c0_i32, %c0_i32_0 : i32, i32
  }
  func.func @transform_2(%arg0: i32) -> (i32, i32) {
    %c0_i32 = arith.constant 0 : i32
    %c0_i32_0 = arith.constant 0 : i32
    %c0_i32_1 = arith.constant 0 : i32
    return %c0_i32, %c0_i32_0 : i32, i32
  }
  func.func @transform_3(%arg0: i32) -> (i32, i32) {
    %c0_i32 = arith.constant 0 : i32
    %c0_i32_0 = arith.constant 0 : i32
    %c0_i32_1 = arith.constant 0 : i32
    return %c0_i32, %c0_i32_0 : i32, i32
  }
  func.func @transform_4(%arg0: i32) -> (i32, i32) {
    %c0_i32 = arith.constant 0 : i32
    %c0_i32_0 = arith.constant 0 : i32
    %c0_i32_1 = arith.constant 0 : i32
    return %c0_i32, %c0_i32_0 : i32, i32
  }
  func.func @transform_5(%arg0: i32) -> (i32, i32) {
    %c0_i32 = arith.constant 0 : i32
    %c0_i32_0 = arith.constant 0 : i32
    %c0_i32_1 = arith.constant 0 : i32
    return %c0_i32, %c0_i32_0 : i32, i32
  }
  func.func @transform_6(%arg0: i32) -> (i32, i32) {
    %c0_i32 = arith.constant 0 : i32
    %c0_i32_0 = arith.constant 0 : i32
    %c0_i32_1 = arith.constant 0 : i32
    return %c0_i32, %c0_i32_0 : i32, i32
  }
  func.func @transform_7(%arg0: i32) -> (i32, i32) {
    %c0_i32 = arith.constant 0 : i32
    %c0_i32_0 = arith.constant 0 : i32
    return %arg0, %c0_i32 : i32, i32
  }
}

</mosaic_0001>

<llo_original>
// kernel: tpu_custom_call.1
$region0: #{tpu_custom_call.1}
  #allocation0 [shape = 'u32[]', space=smem, size = 0x4, offset = 0x4, fixed_abs, tag = 'smem constant byte address 0x4 - core index']
  #allocation1 [shape = 'u32[144,128]{1,0:T(1,128)}', space=vmem, size = 0x12000, scoped, tag = 'internal scratch']
  %s0 = inlined_call_operand.vmem [shape: f32[256,32], index: 0, kind: input, shape index: {}]
  %s1 = inlined_call_operand.vmem [shape: bf16[32,128], index: 1, kind: input, shape index: {}]
  %s2 = inlined_call_operand.vmem [shape: f32[1,128], index: 2, kind: input, shape index: {}]
  %s3 = inlined_call_operand.vmem [shape: bf16[128,64], index: 3, kind: input, shape index: {}]
  %s4 = inlined_call_operand.vmem [shape: f32[1,64], index: 4, kind: input, shape index: {}]
  %s5 = inlined_call_operand.vmem [shape: bf16[64,8], index: 5, kind: input, shape index: {}]
  %s6 = inlined_call_operand.vmem [shape: f32[1,8], index: 6, kind: input, shape index: {}]
  %s7 = inlined_call_operand.vmem [shape: f32[256,8], index: 7, kind: output, shape index: {}]
  %s8 = sld [smem:[#allocation0]]
  $region61: #{tpu_custom_call.1} parent=0
    _
  %s10 = ssub.s32 1, %s8
  %s11 = scalar_select 0, %s10, %s8
  loop: start=0, step=1, limit=4
  $region2: #{tpu_custom_call.1} parent=0 // loop_pre_header
    _
  $region3: #{tpu_custom_call.1} parent=0 // loop_header
    %s13 = sphi 0, %s17
    %p14 = scmp.ge.s32.totalorder %s13, 4
    %s23 = sphi 0, %s25
    %s26 = sphi 0, %s23
    %s27 = sphi 0, %s26
    %s43 = sphi 0, %s27
    %s47 = sphi 0, %s47
    %s49 = sphi 0, %s47
    %s50 = sphi 0, %s49
    %s64 = sphi 0, %s50
    %s68 = sphi 0, %s68
    %s70 = sphi 0, %s68
    %s71 = sphi 0, %s70
    %s85 = sphi 0, %s71
    %s89 = sphi 0, %s89
    %s91 = sphi 0, %s89
    %s92 = sphi 0, %s91
    %s106 = sphi 0, %s92
    %s110 = sphi 0, %s110
    %s112 = sphi 0, %s110
    %s113 = sphi 0, %s112
    %s127 = sphi 0, %s113
    %s131 = sphi 0, %s131
    %s133 = sphi 0, %s131
    %s134 = sphi 0, %s133
    %s148 = sphi 0, %s134
    %s152 = sphi 0, %s152
    %s154 = sphi 0, %s152
    %s155 = sphi 0, %s154
    %s169 = sphi 0, %s155
    %s175 = sphi 0, %s177
    %s178 = sphi 0, %s175
    %s179 = sphi 0, %s178
    %s195 = sphi 0, %s179
  $region4: #{tpu_custom_call.1} parent=0 // loop_header_branch
    %16 = sbr.rel (%p14) target = $region8
  $region5: #{tpu_custom_call.1} parent=0 // loop_body
    %s18 = ssub.s32 %s13, 1
    %s19 = ssub.s32 %s13, 2
    %s20 = sadd.s32 %s13, 1
    %s21 = ssub.s32 %s13, %s20
    %p22 = scmp.eq.s32.totalorder %s21, 0
    %s24 = sadd.s32 %s23, 1
    %s25 = scalar_select %p22, %s23, %s24
    %p28 = pneg %p22
    %p29 = scmp.eq.s32.totalorder %s13, 1
    %p30 = por %p28, %p29
    %p31 = scmp.ne.s32.totalorder %s23, %s26
    %p32 = scmp.eq.s32.totalorder %s13, 0
    %p33 = por %p31, %p32
    %p34 = scmp.ne.s32.totalorder %s23, %s26
    %p35 = scmp.eq.s32.totalorder %s18, 1
    %p36 = por %p34, %p35
    %p37 = scmp.ne.s32.totalorder %s26, %s27
    %p38 = scmp.eq.s32.totalorder %s18, 0
    %p39 = por %p37, %p38
    %p40 = scmp.ne.s32.totalorder %s26, %s27
    %p41 = scmp.eq.s32.totalorder %s19, 1
    %p42 = por %p40, %p41
    %p44 = scmp.ne.s32.totalorder %s27, %s43
    %p45 = scmp.eq.s32.totalorder %s19, 0
    %p46 = por %p44, %p45
    %s48 = sadd.s32 %s47, 1
    %p51 = scmp.eq.s32.totalorder %s13, 1
    %p52 = scmp.ne.s32.totalorder %s47, %s49
    %p53 = scmp.eq.s32.totalorder %s13, 0
    %p54 = por %p52, %p53
    %p55 = scmp.ne.s32.totalorder %s47, %s49
    %p56 = scmp.eq.s32.totalorder %s18, 1
    %p57 = por %p55, %p56
    %p58 = scmp.ne.s32.totalorder %s49, %s50
    %p59 = scmp.eq.s32.totalorder %s18, 0
    %p60 = por %p58, %p59
    %p61 = scmp.ne.s32.totalorder %s49, %s50
    %p62 = scmp.eq.s32.totalorder %s19, 1
    %p63 = por %p61, %p62
    %p65 = scmp.ne.s32.totalorder %s50, %s64
    %p66 = scmp.eq.s32.totalorder %s19, 0
    %p67 = por %p65, %p66
    %s69 = sadd.s32 %s68, 1
    %p72 = scmp.eq.s32.totalorder %s13, 1
    %p73 = scmp.ne.s32.totalorder %s68, %s70
    %p74 = scmp.eq.s32.totalorder %s13, 0
    %p75 = por %p73, %p74
    %p76 = scmp.ne.s32.totalorder %s68, %s70
    %p77 = scmp.eq.s32.totalorder %s18, 1
    %p78 = por %p76, %p77
    %p79 = scmp.ne.s32.totalorder %s70, %s71
    %p80 = scmp.eq.s32.totalorder %s18, 0
    %p81 = por %p79, %p80
    %p82 = scmp.ne.s32.totalorder %s70, %s71
    %p83 = scmp.eq.s32.totalorder %s19, 1
    %p84 = por %p82, %p83
    %p86 = scmp.ne.s32.totalorder %s71, %s85
    %p87 = scmp.eq.s32.totalorder %s19, 0
    %p88 = por %p86, %p87
    %s90 = sadd.s32 %s89, 1
    %p93 = scmp.eq.s32.totalorder %s13, 1
    %p94 = scmp.ne.s32.totalorder %s89, %s91
    %p95 = scmp.eq.s32.totalorder %s13, 0
    %p96 = por %p94, %p95
    %p97 = scmp.ne.s32.totalorder %s89, %s91
    %p98 = scmp.eq.s32.totalorder %s18, 1
    %p99 = por %p97, %p98
    %p100 = scmp.ne.s32.totalorder %s91, %s92
    %p101 = scmp.eq.s32.totalorder %s18, 0
    %p102 = por %p100, %p101
    %p103 = scmp.ne.s32.totalorder %s91, %s92
    %p104 = scmp.eq.s32.totalorder %s19, 1
    %p105 = por %p103, %p104
    %p107 = scmp.ne.s32.totalorder %s92, %s106
    %p108 = scmp.eq.s32.totalorder %s19, 0
    %p109 = por %p107, %p108
    %s111 = sadd.s32 %s110, 1
    %p114 = scmp.eq.s32.totalorder %s13, 1
    %p115 = scmp.ne.s32.totalorder %s110, %s112
    %p116 = scmp.eq.s32.totalorder %s13, 0
    %p117 = por %p115, %p116
    %p118 = scmp.ne.s32.totalorder %s110, %s112
    %p119 = scmp.eq.s32.totalorder %s18, 1
    %p120 = por %p118, %p119
    %p121 = scmp.ne.s32.totalorder %s112, %s113
    %p122 = scmp.eq.s32.totalorder %s18, 0
    %p123 = por %p121, %p122
    %p124 = scmp.ne.s32.totalorder %s112, %s113
    %p125 = scmp.eq.s32.totalorder %s19, 1
    %p126 = por %p124, %p125
    %p128 = scmp.ne.s32.totalorder %s113, %s127
    %p129 = scmp.eq.s32.totalorder %s19, 0
    %p130 = por %p128, %p129
    %s132 = sadd.s32 %s131, 1
    %p135 = scmp.eq.s32.totalorder %s13, 1
    %p136 = scmp.ne.s32.totalorder %s131, %s133
    %p137 = scmp.eq.s32.totalorder %s13, 0
    %p138 = por %p136, %p137
    %p139 = scmp.ne.s32.totalorder %s131, %s133
    %p140 = scmp.eq.s32.totalorder %s18, 1
    %p141 = por %p139, %p140
    %p142 = scmp.ne.s32.totalorder %s133, %s134
    %p143 = scmp.eq.s32.totalorder %s18, 0
    %p144 = por %p142, %p143
    %p145 = scmp.ne.s32.totalorder %s133, %s134
    %p146 = scmp.eq.s32.totalorder %s19, 1
    %p147 = por %p145, %p146
    %p149 = scmp.ne.s32.totalorder %s134, %s148
    %p150 = scmp.eq.s32.totalorder %s19, 0
    %p151 = por %p149, %p150
    %s153 = sadd.s32 %s152, 1
    %p156 = scmp.eq.s32.totalorder %s13, 1
    %p157 = scmp.ne.s32.totalorder %s152, %s154
    %p158 = scmp.eq.s32.totalorder %s13, 0
    %p159 = por %p157, %p158
    %p160 = scmp.ne.s32.totalorder %s152, %s154
    %p161 = scmp.eq.s32.totalorder %s18, 1
    %p162 = por %p160, %p161
    %p163 = scmp.ne.s32.totalorder %s154, %s155
    %p164 = scmp.eq.s32.totalorder %s18, 0
    %p165 = por %p163, %p164
    %p166 = scmp.ne.s32.totalorder %s154, %s155
    %p167 = scmp.eq.s32.totalorder %s19, 1
    %p168 = por %p166, %p167
    %p170 = scmp.ne.s32.totalorder %s155, %s169
    %p171 = scmp.eq.s32.totalorder %s19, 0
    %p172 = por %p170, %p171
    %s173 = ssub.s32 %s13, %s20
    %p174 = scmp.eq.s32.totalorder %s173, 0
    %s176 = sadd.s32 %s175, 1
    %s177 = scalar_select %p174, %s175, %s176
    %p180 = pneg %p174
    %p181 = scmp.eq.s32.totalorder %s13, 1
    %p182 = por %p180, %p181
    %p183 = scmp.ne.s32.totalorder %s175, %s178
    %p184 = scmp.eq.s32.totalorder %s13, 0
    %p185 = por %p183, %p184
    %p186 = scmp.ne.s32.totalorder %s175, %s178
    %p187 = scmp.eq.s32.totalorder %s18, 1
    %p188 = por %p186, %p187
    %p189 = scmp.ne.s32.totalorder %s178, %s179
    %p190 = scmp.eq.s32.totalorder %s18, 0
    %p191 = por %p189, %p190
    %p192 = scmp.ne.s32.totalorder %s178, %s179
    %p193 = scmp.eq.s32.totalorder %s19, 1
    %p194 = por %p192, %p193
    %p196 = scmp.ne.s32.totalorder %s179, %s195
    %p197 = scmp.eq.s32.totalorder %s19, 0
    %p198 = por %p196, %p197
    %p199 = scmp.le.s32.totalorder 1, %s13
    %p200 = scmp.lt.s32.totalorder %s13, 3
    %p201 = pnand %p199, %p200
    %p202 = pneg %p201
    // Predicated region
    $region9: #{tpu_custom_call.1} parent=5 // pred_check
      _
    $region10: #{tpu_custom_call.1} parent=5 // pred_check_branch
      %204 = sbr.rel (%p201) target = $region12
    $region11: #{tpu_custom_call.1} parent=5 // pred_region
      %s205 = ssub.s32 %s13, 1
      // Predicated region
      $region13: #{tpu_custom_call.1} parent=11 // pred_check
        %p206 = pneg %p60
      $region14: #{tpu_custom_call.1} parent=11 // pred_check_branch
        %208 = sbr.rel (%p206) target = $region16
      $region15: #{tpu_custom_call.1} parent=11 // pred_region
        _
      $region16: #{tpu_custom_call.1} parent=11 // pred_fallthru
        _
      // Predicated region
      $region17: #{tpu_custom_call.1} parent=11 // pred_check
        %p209 = pneg %p81
      $region18: #{tpu_custom_call.1} parent=11 // pred_check_branch
        %211 = sbr.rel (%p209) target = $region20
      $region19: #{tpu_custom_call.1} parent=11 // pred_region
        _
      $region20: #{tpu_custom_call.1} parent=11 // pred_fallthru
        _
      // Predicated region
      $region21: #{tpu_custom_call.1} parent=11 // pred_check
        %p212 = pneg %p102
      $region22: #{tpu_custom_call.1} parent=11 // pred_check_branch
        %214 = sbr.rel (%p212) target = $region24
      $region23: #{tpu_custom_call.1} parent=11 // pred_region
        _
      $region24: #{tpu_custom_call.1} parent=11 // pred_fallthru
        _
      // Predicated region
      $region25: #{tpu_custom_call.1} parent=11 // pred_check
        %p215 = pneg %p123
      $region26: #{tpu_custom_call.1} parent=11 // pred_check_branch
        %217 = sbr.rel (%p215) target = $region28
      $region27: #{tpu_custom_call.1} parent=11 // pred_region
        _
      $region28: #{tpu_custom_call.1} parent=11 // pred_fallthru
        _
      // Predicated region
      $region29: #{tpu_custom_call.1} parent=11 // pred_check
        %p218 = pneg %p144
      $region30: #{tpu_custom_call.1} parent=11 // pred_check_branch
        %220 = sbr.rel (%p218) target = $region32
      $region31: #{tpu_custom_call.1} parent=11 // pred_region
        _
      $region32: #{tpu_custom_call.1} parent=11 // pred_fallthru
        _
      // Predicated region
      $region33: #{tpu_custom_call.1} parent=11 // pred_check
        %p221 = pneg %p165
      $region34: #{tpu_custom_call.1} parent=11 // pred_check_branch
        %223 = sbr.rel (%p221) target = $region36
      $region35: #{tpu_custom_call.1} parent=11 // pred_region
        _
      $region36: #{tpu_custom_call.1} parent=11 // pred_fallthru
        _
    $region12: #{tpu_custom_call.1} parent=5 // pred_fallthru
      _
    %p224 = scmp.lt.s32.totalorder %s13, 2
    // Predicated region
    $region37: #{tpu_custom_call.1} parent=5 // pred_check
      %p225 = pneg %p224
    $region38: #{tpu_custom_call.1} parent=5 // pred_check_branch
      %227 = sbr.rel (%p225) target = $region40
    $region39: #{tpu_custom_call.1} parent=5 // pred_region
      // Predicated region
      $region41: #{tpu_custom_call.1} parent=39 // pred_check
        %p228 = pneg %p33
      $region42: #{tpu_custom_call.1} parent=39 // pred_check_branch
        %230 = sbr.rel (%p228) target = $region44
      $region43: #{tpu_custom_call.1} parent=39 // pred_region
        %s231 = smul.u32 16, %s13
        %p232 = scmp.lt.s32.totalorder %s231, 31
        %s233 = scalar_select %p232, %s231, 31
        %s234 = smul.addr %s233, 8
        %s235 = scalar_lea.vmem %s0, %s234
        %s236 = smul.u32 16, %s13
      $region44: #{tpu_custom_call.1} parent=39 // pred_fallthru
        _
    $region40: #{tpu_custom_call.1} parent=5 // pred_fallthru
      _
    %p237 = scmp.le.s32.totalorder 1, %s13
    %p238 = scmp.lt.s32.totalorder %s13, 3
    %p239 = pnand %p237, %p238
    %p240 = pneg %p239
    // Predicated region
    $region45: #{tpu_custom_call.1} parent=5 // pred_check
      _
    $region46: #{tpu_custom_call.1} parent=5 // pred_check_branch
      %242 = sbr.rel (%p239) target = $region48
    $region47: #{tpu_custom_call.1} parent=5 // pred_region
      %s243 = ssub.s32 %s13, 1
      %s244 = smul.u32 16, %s18
      %p245 = scmp.lt.s32.totalorder %s244, 31
      %s246 = scalar_select %p245, %s244, 31
      %s247 = smul.addr %s246, 8
      %s248 = scalar_lea.vmem %s0, %s247
      %p249 = pneg %p39
      %p250 = pneg %p36
      %p251 = pneg %p60
      %p252 = pneg %p57
      %p253 = pneg %p81
      %p254 = pneg %p78
      %p255 = pneg %p102
      %p256 = pneg %p99
      %p257 = pneg %p123
      %p258 = pneg %p120
      %p259 = pneg %p144
      %p260 = pneg %p141
      %p261 = pneg %p165
      %p262 = pneg %p162
      %p263 = pneg %p191
      %p264 = pneg %p188
      %s265 = smul.u32 16, %s18
      %p266 = scmp.lt.s32.totalorder %s265, 31
      %s267 = scalar_select %p266, %s265, 31
      %s268 = smul.addr %s267, 8
      %s269 = scalar_lea.vmem %s7, %s268
      %s270 = smul.u32 16, %s18
      %p271 = scmp.lt.s32.totalorder %s270, 31
      %s272 = scalar_select %p271, %s270, 31
      %s273 = smul.addr %s272, 8
      %s274 = scalar_lea.vmem %s0, %s273
      %s275 = smul.u32 16, %s18
      %s276 = smul.u32 16, %s18
      %p277 = scmp.lt.s32.totalorder %s276, 31
      %s278 = scalar_select %p277, %s276, 31
      %s279 = smul.addr %s278, 8
      %s280 = scalar_lea.vmem %s7, %s279
      %s281 = smul.u32 16, %s18
      %v283 = vld [vmem:[%s274] sm:$0xff]
      %v284 = vld [vmem:[%s274 + $0x8] sm:$0xff]
      %v285 = vld [vmem:[%s274 + $0x10] sm:$0xff]
      %v286 = vld [vmem:[%s274 + $0x18] sm:$0xff]
      %v287 = vld [vmem:[%s274 + $0x20] sm:$0xff]
      %v288 = vld [vmem:[%s274 + $0x28] sm:$0xff]
      %v289 = vld [vmem:[%s274 + $0x30] sm:$0xff]
      %v290 = vld [vmem:[%s274 + $0x38] sm:$0xff]
      %v291 = vld [vmem:[%s274 + $0x40] sm:$0xff]
      %v292 = vld [vmem:[%s274 + $0x48] sm:$0xff]
      %v293 = vld [vmem:[%s274 + $0x50] sm:$0xff]
      %v294 = vld [vmem:[%s274 + $0x58] sm:$0xff]
      %v295 = vld [vmem:[%s274 + $0x60] sm:$0xff]
      %v296 = vld [vmem:[%s274 + $0x68] sm:$0xff]
      %v297 = vld [vmem:[%s274 + $0x70] sm:$0xff]
      %v298 = vld [vmem:[%s274 + $0x78] sm:$0xff]
      %v299 = vpack.c.bf16 %v284, %v283
      %v300 = vpack.c.bf16 %v286, %v285
      %v301 = vpack.c.bf16 %v288, %v287
      %v302 = vpack.c.bf16 %v290, %v289
      %v303 = vpack.c.bf16 %v292, %v291
      %v304 = vpack.c.bf16 %v294, %v293
      %v305 = vpack.c.bf16 %v296, %v295
      %v306 = vpack.c.bf16 %v298, %v297
      %v307 = vld [vmem:[%s1] sm:$0xf]
      %v308 = vld [vmem:[%s1 + $0x4] sm:$0xf]
      %v309 = vld [vmem:[%s1 + $0x8] sm:$0xf]
      %v310 = vld [vmem:[%s1 + $0xc] sm:$0xf]
      %v311 = vld [vmem:[%s2] sm:$0x1]
      %v313 = vlaneseq
      %v314 = vshrl.u32 %v313, 7
      %v315 = vsub.s32 0, %v314
      %v316 = vrot.slane %v311, %v315
      %v322 = vunpack.c.l.b16 %v307
      %v323 = vunpack.c.l.b16 %v308
      %v324 = vunpack.c.l.b16 %v309
      %v325 = vunpack.c.l.b16 %v310
      %v326 = vpack.c.b16 %v323, %v322
      %v327 = vpack.c.b16 %v325, %v324
      %vm330 = vcmask 261120
      %v332 = vsel %vm330, %v299, 0
      %v335 = vsel %vm330, %v300, 0
      %v338 = vsel %vm330, %v301, 0
      %v341 = vsel %vm330, %v302, 0
      %v344 = vsel %vm330, %v303, 0
      %v347 = vsel %vm330, %v304, 0
      %v350 = vsel %vm330, %v305, 0
      %v353 = vsel %vm330, %v306, 0
      %355 = vmatprep.subr.bf16.mxu0 0
      %356 = vmatpush1.bf16.msra.mxu0 %v326
      %357 = vmatprep.subr.bf16.mxu0 0
      %358 = vmatpush1.bf16.msra.mxu0 %v327
      %359 = vmatprep.subr.bf16.mxu0 0
      %360 = vmatpush1.bf16.msra.mxu0 0
      %361 = vmatprep.subr.bf16.mxu0 0
      %362 = vmatpush1.bf16.msra.mxu0 0
      %363 = vmatprep.subr.bf16.mxu0 0
      %364 = vmatpush1.bf16.msra.mxu0 0
      %365 = vmatprep.subr.bf16.mxu0 0
      %366 = vmatpush1.bf16.msra.mxu0 0
      %367 = vmatprep.subr.bf16.mxu0 0
      %368 = vmatpush1.bf16.msra.mxu0 0
      %369 = vmatprep.subr.bf16.mxu0 0
      %370 = vmatpush1.bf16.msra.mxu0 0
      %371 = vmatprep.subr.bf16.mxu0 0
      %372 = vmatpush1.bf16.msra.mxu0 0
      %373 = vmatprep.subr.bf16.mxu0 0
      %374 = vmatpush1.bf16.msra.mxu0 0
      %375 = vmatprep.subr.bf16.mxu0 0
      %376 = vmatpush1.bf16.msra.mxu0 0
      %377 = vmatprep.subr.bf16.mxu0 0
      %378 = vmatpush1.bf16.msra.mxu0 0
      %379 = vmatprep.subr.bf16.mxu0 0
      %380 = vmatpush1.bf16.msra.mxu0 0
      %381 = vmatprep.subr.bf16.mxu0 0
      %382 = vmatpush1.bf16.msra.mxu0 0
      %383 = vmatprep.subr.bf16.mxu0 0
      %384 = vmatpush1.bf16.msra.mxu0 0
      %385 = vmatprep.subr.bf16.mxu0 0
      %386 = vmatpush1.bf16.msra.mxu0 0
      %387 = vmatprep.mubr.bf16.mxu0 0
      %388 = vmatmul.mubr.bf16.gmra.mrb[0].mxu0 %v332
      %v389 = vpop.f32.mrb[0].mxu0
      %v390 = vadd.f32 %v316, %v389
      %v391 = vpop.f32.mrb[0].mxu0
      %v392 = vpop.f32.mrb[0].mxu0
      %v393 = vadd.f32 %v316, %v392
      %v394 = vpop.f32.mrb[0].mxu0
      %395 = vmatprep.mubr.bf16.mxu0 0
      %396 = vmatmul.mubr.bf16.gmra.mrb[0].mxu0 %v335
      %v397 = vpop.f32.mrb[0].mxu0
      %v398 = vadd.f32 %v316, %v397
      %v399 = vpop.f32.mrb[0].mxu0
      %v400 = vpop.f32.mrb[0].mxu0
      %v401 = vadd.f32 %v316, %v400
      %v402 = vpop.f32.mrb[0].mxu0
      %403 = vmatprep.mubr.bf16.mxu0 0
      %404 = vmatmul.mubr.bf16.gmra.mrb[0].mxu0 %v338
      %v405 = vpop.f32.mrb[0].mxu0
      %v406 = vadd.f32 %v316, %v405
      %v407 = vpop.f32.mrb[0].mxu0
      %v408 = vpop.f32.mrb[0].mxu0
      %v409 = vadd.f32 %v316, %v408
      %v410 = vpop.f32.mrb[0].mxu0
      %411 = vmatprep.mubr.bf16.mxu0 0
      %412 = vmatmul.mubr.bf16.gmra.mrb[0].mxu0 %v341
      %v413 = vpop.f32.mrb[0].mxu0
      %v414 = vadd.f32 %v316, %v413
      %v415 = vpop.f32.mrb[0].mxu0
      %v416 = vpop.f32.mrb[0].mxu0
      %v417 = vadd.f32 %v316, %v416
      %v418 = vpop.f32.mrb[0].mxu0
      %419 = vmatprep.mubr.bf16.mxu0 0
      %420 = vmatmul.mubr.bf16.gmra.mrb[0].mxu0 %v344
      %v421 = vpop.f32.mrb[0].mxu0
      %v422 = vadd.f32 %v316, %v421
      %v423 = vpop.f32.mrb[0].mxu0
      %v424 = vpop.f32.mrb[0].mxu0
      %v425 = vadd.f32 %v316, %v424
      %v426 = vpop.f32.mrb[0].mxu0
      %427 = vmatprep.mubr.bf16.mxu0 0
      %428 = vmatmul.mubr.bf16.gmra.mrb[0].mxu0 %v347
      %v429 = vpop.f32.mrb[0].mxu0
      %v430 = vadd.f32 %v316, %v429
      %v431 = vpop.f32.mrb[0].mxu0
      %v432 = vpop.f32.mrb[0].mxu0
      %v433 = vadd.f32 %v316, %v432
      %v434 = vpop.f32.mrb[0].mxu0
      %435 = vmatprep.mubr.bf16.mxu0 0
      %436 = vmatmul.mubr.bf16.gmra.mrb[0].mxu0 %v350
      %v437 = vpop.f32.mrb[0].mxu0
      %v438 = vadd.f32 %v316, %v437
      %v439 = vpop.f32.mrb[0].mxu0
      %v440 = vpop.f32.mrb[0].mxu0
      %v441 = vadd.f32 %v316, %v440
      %v442 = vpop.f32.mrb[0].mxu0
      %443 = vmatprep.mubr.bf16.mxu0 0
      %444 = vmatmul.mubr.bf16.gmra.mrb[0].mxu0 %v353
      %v445 = vpop.f32.mrb[0].mxu0
      %v446 = vadd.f32 %v316, %v445
      %v447 = vpop.f32.mrb[0].mxu0
      %v448 = vpop.f32.mrb[0].mxu0
      %v449 = vadd.f32 %v316, %v448
      %v450 = vpop.f32.mrb[0].mxu0
      %451 = vdwg.mxu0
      %v452 = vmax.f32 %v390, 0.0
      %v453 = vmax.f32 %v393, 0.0
      %v454 = vmax.f32 %v398, 0.0
      %v455 = vmax.f32 %v401, 0.0
      %v456 = vmax.f32 %v406, 0.0
      %v457 = vmax.f32 %v409, 0.0
      %v458 = vmax.f32 %v414, 0.0
      %v459 = vmax.f32 %v417, 0.0
      %v460 = vmax.f32 %v422, 0.0
      %v461 = vmax.f32 %v425, 0.0
      %v462 = vmax.f32 %v430, 0.0
      %v463 = vmax.f32 %v433, 0.0
      %v464 = vmax.f32 %v438, 0.0
      %v465 = vmax.f32 %v441, 0.0
      %v466 = vmax.f32 %v446, 0.0
      %v467 = vmax.f32 %v449, 0.0
      %v468 = vpack.c.bf16 %v453, %v452
      %v469 = vpack.c.bf16 %v455, %v454
      %v470 = vpack.c.bf16 %v457, %v456
      %v471 = vpack.c.bf16 %v459, %v458
      %v472 = vpack.c.bf16 %v461, %v460
      %v473 = vpack.c.bf16 %v463, %v462
      %v474 = vpack.c.bf16 %v465, %v464
      %v475 = vpack.c.bf16 %v467, %v466
      %v476 = vld [vmem:[%s3] sm:$0xf]
      %v477 = vld [vmem:[%s3 + $0x4] sm:$0xf]
      %v478 = vld [vmem:[%s3 + $0x8] sm:$0xf]
      %v479 = vld [vmem:[%s3 + $0xc] sm:$0xf]
      %v480 = vld [vmem:[%s3 + $0x10] sm:$0xf]
      %v481 = vld [vmem:[%s3 + $0x14] sm:$0xf]
      %v482 = vld [vmem:[%s3 + $0x18] sm:$0xf]
      %v483 = vld [vmem:[%s3 + $0x1c] sm:$0xf]
      %v484 = vld [vmem:[%s3 + $0x20] sm:$0xf]
      %v485 = vld [vmem:[%s3 + $0x24] sm:$0xf]
      %v486 = vld [vmem:[%s3 + $0x28] sm:$0xf]
      %v487 = vld [vmem:[%s3 + $0x2c] sm:$0xf]
      %v488 = vld [vmem:[%s3 + $0x30] sm:$0xf]
      %v489 = vld [vmem:[%s3 + $0x34] sm:$0xf]
      %v490 = vld [vmem:[%s3 + $0x38] sm:$0xf]
      %v491 = vld [vmem:[%s3 + $0x3c] sm:$0xf]
      %v492 = vld [vmem:[%s4] sm:$0x1]
      %v494 = vlaneseq
      %v495 = vshrl.u32 %v494, 7
      %v496 = vsub.s32 0, %v495
      %v497 = vrot.slane %v492, %v496
      %v515 = vunpack.c.l.b16 %v476
      %v516 = vunpack.c.l.b16 %v477
      %v517 = vunpack.c.l.b16 %v478
      %v518 = vunpack.c.l.b16 %v479
      %v519 = vunpack.c.l.b16 %v480
      %v520 = vunpack.c.l.b16 %v481
      %v521 = vunpack.c.l.b16 %v482
      %v522 = vunpack.c.l.b16 %v483
      %v523 = vunpack.c.l.b16 %v484
      %v524 = vunpack.c.l.b16 %v485
      %v525 = vunpack.c.l.b16 %v486
      %v526 = vunpack.c.l.b16 %v487
      %v527 = vunpack.c.l.b16 %v488
      %v528 = vunpack.c.l.b16 %v489
      %v529 = vunpack.c.l.b16 %v490
      %v530 = vunpack.c.l.b16 %v491
      %v531 = vpack.c.b16 %v516, %v515
      %v532 = vpack.c.b16 %v518, %v517
      %v533 = vpack.c.b16 %v520, %v519
      %v534 = vpack.c.b16 %v522, %v521
      %v535 = vpack.c.b16 %v524, %v523
      %v536 = vpack.c.b16 %v526, %v525
      %v537 = vpack.c.b16 %v528, %v527
      %v538 = vpack.c.b16 %v530, %v529
      %547 = vmatprep.subr.bf16.mxu0 0
      %548 = vmatpush1.bf16.msra.mxu0 %v531
      %549 = vmatprep.subr.bf16.mxu0 0
      %550 = vmatpush1.bf16.msra.mxu0 %v532
      %551 = vmatprep.subr.bf16.mxu0 0
      %552 = vmatpush1.bf16.msra.mxu0 %v533
      %553 = vmatprep.subr.bf16.mxu0 0
      %554 = vmatpush1.bf16.msra.mxu0 %v534
      %555 = vmatprep.subr.bf16.mxu0 0
      %556 = vmatpush1.bf16.msra.mxu0 %v535
      %557 = vmatprep.subr.bf16.mxu0 0
      %558 = vmatpush1.bf16.msra.mxu0 %v536
      %559 = vmatprep.subr.bf16.mxu0 0
      %560 = vmatpush1.bf16.msra.mxu0 %v537
      %561 = vmatprep.subr.bf16.mxu0 0
      %562 = vmatpush1.bf16.msra.mxu0 %v538
      %563 = vmatprep.subr.bf16.mxu0 0
      %564 = vmatpush1.bf16.msra.mxu0 0
      %565 = vmatprep.subr.bf16.mxu0 0
      %566 = vmatpush1.bf16.msra.mxu0 0
      %567 = vmatprep.subr.bf16.mxu0 0
      %568 = vmatpush1.bf16.msra.mxu0 0
      %569 = vmatprep.subr.bf16.mxu0 0
      %570 = vmatpush1.bf16.msra.mxu0 0
      %571 = vmatprep.subr.bf16.mxu0 0
      %572 = vmatpush1.bf16.msra.mxu0 0
      %573 = vmatprep.subr.bf16.mxu0 0
      %574 = vmatpush1.bf16.msra.mxu0 0
      %575 = vmatprep.subr.bf16.mxu0 0
      %576 = vmatpush1.bf16.msra.mxu0 0
      %577 = vmatprep.subr.bf16.mxu0 0
      %578 = vmatpush1.bf16.msra.mxu0 0
      %579 = vmatprep.mubr.bf16.mxu0 0
      %580 = vmatmul.mubr.bf16.gmra.mrb[0].mxu0 %v468
      %v581 = vpop.f32.mrb[0].mxu0
      %v582 = vadd.f32 %v497, %v581
      %v583 = vpop.f32.mrb[0].mxu0
      %v584 = vpop.f32.mrb[0].mxu0
      %v585 = vadd.f32 %v497, %v584
      %v586 = vpop.f32.mrb[0].mxu0
      %587 = vmatprep.mubr.bf16.mxu0 0
      %588 = vmatmul.mubr.bf16.gmra.mrb[0].mxu0 %v469
      %v589 = vpop.f32.mrb[0].mxu0
      %v590 = vadd.f32 %v497, %v589
      %v591 = vpop.f32.mrb[0].mxu0
      %v592 = vpop.f32.mrb[0].mxu0
      %v593 = vadd.f32 %v497, %v592
      %v594 = vpop.f32.mrb[0].mxu0
      %595 = vmatprep.mubr.bf16.mxu0 0
      %596 = vmatmul.mubr.bf16.gmra.mrb[0].mxu0 %v470
      %v597 = vpop.f32.mrb[0].mxu0
      %v598 = vadd.f32 %v497, %v597
      %v599 = vpop.f32.mrb[0].mxu0
      %v600 = vpop.f32.mrb[0].mxu0
      %v601 = vadd.f32 %v497, %v600
      %v602 = vpop.f32.mrb[0].mxu0
      %603 = vmatprep.mubr.bf16.mxu0 0
      %604 = vmatmul.mubr.bf16.gmra.mrb[0].mxu0 %v471
      %v605 = vpop.f32.mrb[0].mxu0
      %v606 = vadd.f32 %v497, %v605
      %v607 = vpop.f32.mrb[0].mxu0
      %v608 = vpop.f32.mrb[0].mxu0
      %v609 = vadd.f32 %v497, %v608
      %v610 = vpop.f32.mrb[0].mxu0
      %611 = vmatprep.mubr.bf16.mxu0 0
      %612 = vmatmul.mubr.bf16.gmra.mrb[0].mxu0 %v472
      %v613 = vpop.f32.mrb[0].mxu0
      %v614 = vadd.f32 %v497, %v613
      %v615 = vpop.f32.mrb[0].mxu0
      %v616 = vpop.f32.mrb[0].mxu0
      %v617 = vadd.f32 %v497, %v616
      %v618 = vpop.f32.mrb[0].mxu0
      %619 = vmatprep.mubr.bf16.mxu0 0
      %620 = vmatmul.mubr.bf16.gmra.mrb[0].mxu0 %v473
      %v621 = vpop.f32.mrb[0].mxu0
      %v622 = vadd.f32 %v497, %v621
      %v623 = vpop.f32.mrb[0].mxu0
      %v624 = vpop.f32.mrb[0].mxu0
      %v625 = vadd.f32 %v497, %v624
      %v626 = vpop.f32.mrb[0].mxu0
      %627 = vmatprep.mubr.bf16.mxu0 0
      %628 = vmatmul.mubr.bf16.gmra.mrb[0].mxu0 %v474
      %v629 = vpop.f32.mrb[0].mxu0
      %v630 = vadd.f32 %v497, %v629
      %v631 = vpop.f32.mrb[0].mxu0
      %v632 = vpop.f32.mrb[0].mxu0
      %v633 = vadd.f32 %v497, %v632
      %v634 = vpop.f32.mrb[0].mxu0
      %635 = vmatprep.mubr.bf16.mxu0 0
      %636 = vmatmul.mubr.bf16.gmra.mrb[0].mxu0 %v475
      %v637 = vpop.f32.mrb[0].mxu0
      %v638 = vadd.f32 %v497, %v637
      %v639 = vpop.f32.mrb[0].mxu0
      %v640 = vpop.f32.mrb[0].mxu0
      %v641 = vadd.f32 %v497, %v640
      %v642 = vpop.f32.mrb[0].mxu0
      %643 = vdwg.mxu0
      %v644 = vmax.f32 %v582, 0.0
      %v645 = vmax.f32 %v585, 0.0
      %v646 = vmax.f32 %v590, 0.0
      %v647 = vmax.f32 %v593, 0.0
      %v648 = vmax.f32 %v598, 0.0
      %v649 = vmax.f32 %v601, 0.0
      %v650 = vmax.f32 %v606, 0.0
      %v651 = vmax.f32 %v609, 0.0
      %v652 = vmax.f32 %v614, 0.0
      %v653 = vmax.f32 %v617, 0.0
      %v654 = vmax.f32 %v622, 0.0
      %v655 = vmax.f32 %v625, 0.0
      %v656 = vmax.f32 %v630, 0.0
      %v657 = vmax.f32 %v633, 0.0
      %v658 = vmax.f32 %v638, 0.0
      %v659 = vmax.f32 %v641, 0.0
      %v660 = vpack.c.bf16 %v645, %v644
      %v661 = vpack.c.bf16 %v647, %v646
      %v662 = vpack.c.bf16 %v649, %v648
      %v663 = vpack.c.bf16 %v651, %v650
      %v664 = vpack.c.bf16 %v653, %v652
      %v665 = vpack.c.bf16 %v655, %v654
      %v666 = vpack.c.bf16 %v657, %v656
      %v667 = vpack.c.bf16 %v659, %v658
      %v668 = vld [vmem:[%s5] sm:$0xf]
      %v669 = vld [vmem:[%s5 + $0x4] sm:$0xf]
      %v670 = vld [vmem:[%s5 + $0x8] sm:$0xf]
      %v671 = vld [vmem:[%s5 + $0xc] sm:$0xf]
      %v672 = vld [vmem:[%s5 + $0x10] sm:$0xf]
      %v673 = vld [vmem:[%s5 + $0x14] sm:$0xf]
      %v674 = vld [vmem:[%s5 + $0x18] sm:$0xf]
      %v675 = vld [vmem:[%s5 + $0x1c] sm:$0xf]
      %v676 = vld [vmem:[%s6] sm:$0x1]
      %v678 = vlaneseq
      %v679 = vshrl.u32 %v678, 7
      %v680 = vsub.s32 0, %v679
      %v681 = vrot.slane %v676, %v680
      %v691 = vunpack.c.l.b16 %v668
      %v692 = vunpack.c.l.b16 %v669
      %v693 = vunpack.c.l.b16 %v670
      %v694 = vunpack.c.l.b16 %v671
      %v695 = vunpack.c.l.b16 %v672
      %v696 = vunpack.c.l.b16 %v673
      %v697 = vunpack.c.l.b16 %v674
      %v698 = vunpack.c.l.b16 %v675
      %v699 = vpack.c.b16 %v692, %v691
      %v700 = vpack.c.b16 %v694, %v693
      %v701 = vpack.c.b16 %v696, %v695
      %v702 = vpack.c.b16 %v698, %v697
      %vm707 = vcmask 523264
      %v709 = vsel %vm707, %v660, 0
      %v712 = vsel %vm707, %v661, 0
      %v715 = vsel %vm707, %v662, 0
      %v718 = vsel %vm707, %v663, 0
      %v721 = vsel %vm707, %v664, 0
      %v724 = vsel %vm707, %v665, 0
      %v727 = vsel %vm707, %v666, 0
      %v730 = vsel %vm707, %v667, 0
      %732 = vmatprep.subr.bf16.mxu0 0
      %733 = vmatpush1.bf16.msra.mxu0 %v699
      %734 = vmatprep.subr.bf16.mxu0 0
      %735 = vmatpush1.bf16.msra.mxu0 %v700
      %736 = vmatprep.subr.bf16.mxu0 0
      %737 = vmatpush1.bf16.msra.mxu0 %v701
      %738 = vmatprep.subr.bf16.mxu0 0
      %739 = vmatpush1.bf16.msra.mxu0 %v702
      %740 = vmatprep.subr.bf16.mxu0 0
      %741 = vmatpush1.bf16.msra.mxu0 0
      %742 = vmatprep.subr.bf16.mxu0 0
      %743 = vmatpush1.bf16.msra.mxu0 0
      %744 = vmatprep.subr.bf16.mxu0 0
      %745 = vmatpush1.bf16.msra.mxu0 0
      %746 = vmatprep.subr.bf16.mxu0 0
      %747 = vmatpush1.bf16.msra.mxu0 0
      %748 = vmatprep.subr.bf16.mxu0 0
      %749 = vmatpush1.bf16.msra.mxu0 0
      %750 = vmatprep.subr.bf16.mxu0 0
      %751 = vmatpush1.bf16.msra.mxu0 0
      %752 = vmatprep.subr.bf16.mxu0 0
      %753 = vmatpush1.bf16.msra.mxu0 0
      %754 = vmatprep.subr.bf16.mxu0 0
      %755 = vmatpush1.bf16.msra.mxu0 0
      %756 = vmatprep.subr.bf16.mxu0 0
      %757 = vmatpush1.bf16.msra.mxu0 0
      %758 = vmatprep.subr.bf16.mxu0 0
      %759 = vmatpush1.bf16.msra.mxu0 0
      %760 = vmatprep.subr.bf16.mxu0 0
      %761 = vmatpush1.bf16.msra.mxu0 0
      %762 = vmatprep.subr.bf16.mxu0 0
      %763 = vmatpush1.bf16.msra.mxu0 0
      %764 = vmatprep.mubr.bf16.mxu0 0
      %765 = vmatmul.mubr.bf16.gmra.mrb[0].mxu0 %v709
      %v766 = vpop.f32.mrb[0].mxu0
      %v767 = vadd.f32 %v681, %v766
      %v768 = vpop.f32.mrb[0].mxu0
      %v769 = vpop.f32.mrb[0].mxu0
      %v770 = vadd.f32 %v681, %v769
      %v771 = vpop.f32.mrb[0].mxu0
      %772 = vmatprep.mubr.bf16.mxu0 0
      %773 = vmatmul.mubr.bf16.gmra.mrb[0].mxu0 %v712
      %v774 = vpop.f32.mrb[0].mxu0
      %v775 = vadd.f32 %v681, %v774
      %v776 = vpop.f32.mrb[0].mxu0
      %v777 = vpop.f32.mrb[0].mxu0
      %v778 = vadd.f32 %v681, %v777
      %v779 = vpop.f32.mrb[0].mxu0
      %780 = vmatprep.mubr.bf16.mxu0 0
      %781 = vmatmul.mubr.bf16.gmra.mrb[0].mxu0 %v715
      %v782 = vpop.f32.mrb[0].mxu0
      %v783 = vadd.f32 %v681, %v782
      %v784 = vpop.f32.mrb[0].mxu0
      %v785 = vpop.f32.mrb[0].mxu0
      %v786 = vadd.f32 %v681, %v785
      %v787 = vpop.f32.mrb[0].mxu0
      %788 = vmatprep.mubr.bf16.mxu0 0
      %789 = vmatmul.mubr.bf16.gmra.mrb[0].mxu0 %v718
      %v790 = vpop.f32.mrb[0].mxu0
      %v791 = vadd.f32 %v681, %v790
      %v792 = vpop.f32.mrb[0].mxu0
      %v793 = vpop.f32.mrb[0].mxu0
      %v794 = vadd.f32 %v681, %v793
      %v795 = vpop.f32.mrb[0].mxu0
      %796 = vmatprep.mubr.bf16.mxu0 0
      %797 = vmatmul.mubr.bf16.gmra.mrb[0].mxu0 %v721
      %v798 = vpop.f32.mrb[0].mxu0
      %v799 = vadd.f32 %v681, %v798
      %v800 = vpop.f32.mrb[0].mxu0
      %v801 = vpop.f32.mrb[0].mxu0
      %v802 = vadd.f32 %v681, %v801
      %v803 = vpop.f32.mrb[0].mxu0
      %804 = vmatprep.mubr.bf16.mxu0 0
      %805 = vmatmul.mubr.bf16.gmra.mrb[0].mxu0 %v724
      %v806 = vpop.f32.mrb[0].mxu0
      %v807 = vadd.f32 %v681, %v806
      %v808 = vpop.f32.mrb[0].mxu0
      %v809 = vpop.f32.mrb[0].mxu0
      %v810 = vadd.f32 %v681, %v809
      %v811 = vpop.f32.mrb[0].mxu0
      %812 = vmatprep.mubr.bf16.mxu0 0
      %813 = vmatmul.mubr.bf16.gmra.mrb[0].mxu0 %v727
      %v814 = vpop.f32.mrb[0].mxu0
      %v815 = vadd.f32 %v681, %v814
      %v816 = vpop.f32.mrb[0].mxu0
      %v817 = vpop.f32.mrb[0].mxu0
      %v818 = vadd.f32 %v681, %v817
      %v819 = vpop.f32.mrb[0].mxu0
      %820 = vmatprep.mubr.bf16.mxu0 0
      %821 = vmatmul.mubr.bf16.gmra.mrb[0].mxu0 %v730
      %v822 = vpop.f32.mrb[0].mxu0
      %v823 = vadd.f32 %v681, %v822
      %v824 = vpop.f32.mrb[0].mxu0
      %v825 = vpop.f32.mrb[0].mxu0
      %v826 = vadd.f32 %v681, %v825
      %v827 = vpop.f32.mrb[0].mxu0
      %828 = vdwg.mxu0
      %vm829 = vcmask 64512
      %830 = vst.msk [vmem:[%s280] sm:$0xff] %vm829, %v767
      %831 = vst.msk [vmem:[%s280 + $0x8] sm:$0xff] %vm829, %v770
      %832 = vst.msk [vmem:[%s280 + $0x10] sm:$0xff] %vm829, %v775
      %833 = vst.msk [vmem:[%s280 + $0x18] sm:$0xff] %vm829, %v778
      %834 = vst.msk [vmem:[%s280 + $0x20] sm:$0xff] %vm829, %v783
      %835 = vst.msk [vmem:[%s280 + $0x28] sm:$0xff] %vm829, %v786
      %836 = vst.msk [vmem:[%s280 + $0x30] sm:$0xff] %vm829, %v791
      %837 = vst.msk [vmem:[%s280 + $0x38] sm:$0xff] %vm829, %v794
      %838 = vst.msk [vmem:[%s280 + $0x40] sm:$0xff] %vm829, %v799
      %839 = vst.msk [vmem:[%s280 + $0x48] sm:$0xff] %vm829, %v802
      %840 = vst.msk [vmem:[%s280 + $0x50] sm:$0xff] %vm829, %v807
      %841 = vst.msk [vmem:[%s280 + $0x58] sm:$0xff] %vm829, %v810
      %842 = vst.msk [vmem:[%s280 + $0x60] sm:$0xff] %vm829, %v815
      %843 = vst.msk [vmem:[%s280 + $0x68] sm:$0xff] %vm829, %v818
      %844 = vst.msk [vmem:[%s280 + $0x70] sm:$0xff] %vm829, %v823
      %845 = vst.msk [vmem:[%s280 + $0x78] sm:$0xff] %vm829, %v826
      %s846 = smul.u32 16, %s18
      %p847 = scmp.lt.s32.totalorder %s846, 31
      %s848 = scalar_select %p847, %s846, 31
      %s849 = smul.addr %s848, 8
      %s850 = scalar_lea.vmem %s7, %s849
      // Predicated region
      $region49: #{tpu_custom_call.1} parent=47 // pred_check
        %p851 = pneg %p188
      $region50: #{tpu_custom_call.1} parent=47 // pred_check_branch
        %853 = sbr.rel (%p851) target = $region52
      $region51: #{tpu_custom_call.1} parent=47 // pred_region
        %s854 = smul.u32 16, %s18
      $region52: #{tpu_custom_call.1} parent=47 // pred_fallthru
        _
    $region48: #{tpu_custom_call.1} parent=5 // pred_fallthru
      _
    %p855 = scmp.le.s32.totalorder 2, %s13
    // Predicated region
    $region53: #{tpu_custom_call.1} parent=5 // pred_check
      %p856 = pneg %p855
    $region54: #{tpu_custom_call.1} parent=5 // pred_check_branch
      %858 = sbr.rel (%p856) target = $region56
    $region55: #{tpu_custom_call.1} parent=5 // pred_region
      %s859 = ssub.s32 %s13, 2
      // Predicated region
      $region57: #{tpu_custom_call.1} parent=55 // pred_check
        %p860 = pneg %p194
      $region58: #{tpu_custom_call.1} parent=55 // pred_check_branch
        %862 = sbr.rel (%p860) target = $region60
      $region59: #{tpu_custom_call.1} parent=55 // pred_region
        %s863 = smul.u32 16, %s19
        %p864 = scmp.lt.s32.totalorder %s863, 31
        %s865 = scalar_select %p864, %s863, 31
        %s866 = smul.addr %s865, 8
        %s867 = scalar_lea.vmem %s7, %s866
      $region60: #{tpu_custom_call.1} parent=55 // pred_fallthru
        _
    $region56: #{tpu_custom_call.1} parent=5 // pred_fallthru
      _
  $region6: #{tpu_custom_call.1} parent=0 // loop_footer
    %s17 = sadd.s32 1, %s13
  $region7: #{tpu_custom_call.1} parent=0 // loop_footer_branch
    %12 = sbr.rel target = $region3
  $region8: #{tpu_custom_call.1} parent=0 // loop_exit
    _

</llo_original>
